<compile_context>
chip_gen: v5e
topology: v5e:2x2
jax: 0.10.0
libtpu: 0.0.40
codegen_flags: <defaults>
</compile_context>

<pallas_src>
import functools

import jax
import jax.numpy as jnp
from jax.experimental import pallas as pl
from jax.experimental.pallas import tpu as pltpu

# ---------------------------------------------------------------------------
# Module hyper-parameters (config.sample_pre_symbol chosen small & in-script)
# ---------------------------------------------------------------------------
OUTPUT_CHAN_NUM = 4
EXTF = 1
SAMPLE_PRE_SYMBOL = 8
D_IN = 4 * EXTF * SAMPLE_PRE_SYMBOL * OUTPUT_CHAN_NUM  # = 128
H1, H2, H3, H4 = 128, 32, 8, 1
BN_EPS = 1e-5
VEC_ROWS = 8  # packed small-vector operand rows: g1, be1, g2, be2, g3, be3, w4, b4


# ---------------------------------------------------------------------------
# Kernel
# ---------------------------------------------------------------------------
def discriminator_kernel(x_ref, w1_ref, w2_ref, w3_ref, vec_ref, o_ref,
                         h1_ref, s1_ref, s2_ref, *, b_real, tb):
    i = pl.program_id(0)
    n_pad = h1_ref.shape[0] - b_real            # static (rows past the real batch)
    inv_b = jnp.float32(1.0 / b_real)

    # ------------- Phase 1 (every grid step): layer-1 matmul + BN1 statistics -------
    @pl.when(i == 0)
    def _():
        s1_ref[...] = jnp.zeros_like(s1_ref)
        s2_ref[...] = jnp.zeros_like(s2_ref)

    # bf16 cast happens HERE (not in the wrapper): the only B-scaled HBM read stays a
    # single f32 pass; the cast is one VPU op hidden under the tile DMA.
    h1 = jnp.dot(x_ref[...].astype(jnp.bfloat16), w1_ref[...],
                 preferred_element_type=jnp.float32)            # (tb, H1) f32

    if n_pad:
        # Only the tail tile has rows past the real batch (their x was never defined);
        # zero them so they vanish from the statistics and stay exactly zero in scratch.
        valid = (i * tb + jax.lax.broadcasted_iota(jnp.int32, (tb, 1), 0)) < b_real
        h1 = jnp.where(valid, h1, 0.0)

    # One-pass BN1 sums over the real rows (no layer-1 bias, so zero rows contribute 0).
    s1_ref[...] += jnp.sum(h1, axis=0, keepdims=True)
    s2_ref[...] += jnp.sum(h1 * h1, axis=0, keepdims=True)

    start = i * tb
    if tb % 8 == 0:
        start = pl.multiple_of(start, 8)
    h1_ref[pl.ds(start, tb), :] = h1.astype(jnp.bfloat16)

    # ------------- Phase 2 (last grid step): BN1-apply + layers 2-4 -----------------
    @pl.when(i == pl.num_programs(0) - 1)
    def _():
        # BN1 folded into a single affine: relu(h*scale1 + shift1).
        mean1 = s1_ref[...] * inv_b
        var1 = jnp.maximum(s2_ref[...] * inv_b - mean1 * mean1, 0.0)
        scale1 = vec_ref[0:1, :] * jax.lax.rsqrt(var1 + BN_EPS)     # gamma1 * rsqrt
        shift1 = vec_ref[1:2, :] - mean1 * scale1                   # beta1 - mean*scale

        h1n = jnp.maximum(h1_ref[...].astype(jnp.float32) * scale1 + shift1, 0.0)
        # Value every padded (zero) row takes after BN1+ReLU; used to correct BN2/BN3
        # statistics analytically instead of masking full (B,H) activations.
        pad1 = jnp.maximum(shift1, 0.0) if n_pad else None

        def bn_relu_2pass(h, gamma, beta, pad_row):
            # Exact two-pass biased variance over the REAL rows (cheap: 32/8 lanes).
            s = jnp.sum(h, axis=0, keepdims=True)
            if n_pad:
                s = s - n_pad * pad_row
            mean = s * inv_b
            d = h - mean
            v = jnp.sum(d * d, axis=0, keepdims=True)
            if n_pad:
                dp = pad_row - mean
                v = v - n_pad * (dp * dp)
            var = jnp.maximum(v * inv_b, 0.0)
            scale = gamma * jax.lax.rsqrt(var + BN_EPS)
            out = jnp.maximum(d * scale + beta, 0.0)
            pad_out = (jnp.maximum((pad_row - mean) * scale + beta, 0.0)
                       if n_pad else None)
            return out, pad_out

        # Layer 2: Linear(128,32) with bf16 MXU operands (f32 accumulate) + BN2 + ReLU.
        h2 = jnp.dot(h1n.astype(jnp.bfloat16), w2_ref[...],
                     preferred_element_type=jnp.float32)            # (Bp, H2)
        pad2 = (jnp.dot(pad1.astype(jnp.bfloat16), w2_ref[...],
                        preferred_element_type=jnp.float32) if n_pad else None)
        h2n, pad2n = bn_relu_2pass(h2, vec_ref[2:3, :H2], vec_ref[3:4, :H2], pad2)

        # Layer 3: Linear(32,8) + BN3 + ReLU.
        h3 = jnp.dot(h2n.astype(jnp.bfloat16), w3_ref[...],
                     preferred_element_type=jnp.float32)            # (Bp, H3)
        pad3 = (jnp.dot(pad2n.astype(jnp.bfloat16), w3_ref[...],
                        preferred_element_type=jnp.float32) if n_pad else None)
        h3n, _ = bn_relu_2pass(h3, vec_ref[4:5, :H3], vec_ref[5:6, :H3], pad3)

        # Layer 4: Linear(8,1) as a VPU/XLU weighted sum (below MXU granularity).
        w4 = vec_ref[6:7, :H3]                                      # (1, 8)
        b4 = vec_ref[7:8, 0:1]                                      # (1, 1)
        out = jnp.sum(h3n * w4, axis=-1, keepdims=True) + b4        # (Bp, 1)
        o_ref[...] = out.astype(o_ref.dtype)


# ---------------------------------------------------------------------------
# Wrapper
# ---------------------------------------------------------------------------
def _vmem_limit_bytes():
    """Generation-aware scoped-VMEM limit: ~80% of physical, leaving compiler headroom
    (v5e/v6e: 128 MiB -> ~102 MiB; v7x: 64 MiB -> ~51 MiB)."""
    phys = 64 * 1024 * 1024  # conservative fallback (v7x-sized)
    try:
        phys = int(pltpu.get_tpu_info().vmem_capacity_bytes)
    except Exception:
        pass
    return max(32 * 1024 * 1024, int(phys * 0.8))


@functools.partial(jax.jit, static_argnames=("block_rows",))
def discriminator_forward(x, packed, *, block_rows=None):
    """x: (B, ...) with trailing dims flattening to D_IN; packed from pack_params()."""
    B = x.shape[0]
    x_flat = x.reshape(B, -1)
    assert x_flat.shape[1] == D_IN, (x_flat.shape, D_IN)

    # Batch-tile size: single tile for small batches, 1024-row tiles otherwise.
    if block_rows is None:
        tb = B if B <= 1024 else 1024
    else:
        tb = max(1, min(int(block_rows), B))
    nt = (B + tb - 1) // tb
    if nt > 1:
        assert tb % 8 == 0, "batch tile must be a multiple of 8 when the batch is split"
    b_pad = nt * tb

    kernel = functools.partial(discriminator_kernel, b_real=B, tb=tb)
    operands = (x_flat, packed["w1"], packed["w2"], packed["w3"], packed["vec"])

    out = pl.pallas_call(
        kernel,
        out_shape=jax.ShapeDtypeStruct((b_pad, H4), jnp.float32),
        grid_spec=pltpu.PrefetchScalarGridSpec(
            num_scalar_prefetch=0,
            grid=(nt,),
            in_specs=[
                pl.BlockSpec((tb, D_IN), lambda i: (i, 0)),        # x: streamed (f32)
                pl.BlockSpec((D_IN, H1), lambda i: (0, 0)),        # w1 (bf16, resident)
                pl.BlockSpec((H1, H2), lambda i: (0, 0)),          # w2 (bf16, resident)
                pl.BlockSpec((H2, H3), lambda i: (0, 0)),          # w3 (bf16, resident)
                pl.BlockSpec((VEC_ROWS, 128), lambda i: (0, 0)),   # packed BN/w4/b4 vecs
            ],
            out_specs=pl.BlockSpec((b_pad, H4), lambda i: (0, 0)),
            scratch_shapes=[
                pltpu.VMEM((b_pad, H1), jnp.bfloat16),   # layer-1 activations (parked)
                pltpu.VMEM((1, H1), jnp.float32),        # BN1 running sum
                pltpu.VMEM((1, H1), jnp.float32),        # BN1 running sum of squares
            ],
        ),
        compiler_params=pltpu.CompilerParams(
            dimension_semantics=("arbitrary",),
            vmem_limit_bytes=_vmem_limit_bytes(),
        ),
    )(*operands)
    return out[:B]


# ---------------------------------------------------------------------------
# Parameter handling
# ---------------------------------------------------------------------------
def init_params(key):
    """PyTorch-layout params: Linear weight (out,in), bias (1,out); BN gamma=1, beta=0."""
    keys = jax.random.split(key, 8)

    def lin(kw, kb, fan_in, fan_out):
        scale = 1.0 / jnp.sqrt(jnp.float32(fan_in))
        w = jax.random.uniform(kw, (fan_out, fan_in), jnp.float32, -scale, scale)
        b = jax.random.uniform(kb, (1, fan_out), jnp.float32, -scale, scale)
        return w, b

    w1, b1 = lin(keys[0], keys[1], D_IN, H1)
    w2, b2 = lin(keys[2], keys[3], H1, H2)
    w3, b3 = lin(keys[4], keys[5], H2, H3)
    w4, b4 = lin(keys[6], keys[7], H3, H4)

    return dict(
        w1=w1, b1=b1, g1=jnp.ones((1, H1), jnp.float32), be1=jnp.zeros((1, H1), jnp.float32),
        w2=w2, b2=b2, g2=jnp.ones((1, H2), jnp.float32), be2=jnp.zeros((1, H2), jnp.float32),
        w3=w3, b3=b3, g3=jnp.ones((1, H3), jnp.float32), be3=jnp.zeros((1, H3), jnp.float32),
        w4=w4, b4=b4,
    )


def pack_params(params):
    """One-time prep: pre-transpose weights to (in,out), cast to bf16, and pack the BN
    vectors (+ w4, b4) into a single (8,128) f32 operand.  b1/b2/b3 are intentionally
    NOT packed: a Linear bias feeding training-mode BN is cancelled exactly."""
    def pad_row(v):
        v = jnp.ravel(v).astype(jnp.float32)
        return jnp.pad(v, (0, 128 - v.shape[0]))

    rows = [
        params["g1"], params["be1"],   # rows 0-1 (128 lanes)
        params["g2"], params["be2"],   # rows 2-3 (32 lanes used)
        params["g3"], params["be3"],   # rows 4-5 (8 lanes used)
        params["w4"],                  # row 6    (8 lanes used)
        params["b4"],                  # row 7    (1 lane used)
    ]
    vec = jnp.stack([pad_row(r) for r in rows])          # (8, 128)

    return dict(
        w1=params["w1"].T.astype(jnp.bfloat16),          # (D_IN, 128)
        w2=params["w2"].T.astype(jnp.bfloat16),          # (128, 32)
        w3=params["w3"].T.astype(jnp.bfloat16),          # (32, 8)
        vec=vec,
    )


# ---------------------------------------------------------------------------
# Pure-JAX references
# ---------------------------------------------------------------------------
def _ref_f32(x, p):
    """Full-f32 PyTorch-equivalent math (biases included; training-mode BN)."""
    h = x.reshape(x.shape[0], -1)

    def bn_relu(h, g, be):
        m = h.mean(0, keepdims=True)
        v = ((h - m) ** 2).mean(0, keepdims=True)
        return jnp.maximum((h - m) * jax.lax.rsqrt(v + BN_EPS) * g + be, 0.0)

    h = h @ p["w1"].T + p["b1"]; h = bn_relu(h, p["g1"], p["be1"])
    h = h @ p["w2"].T + p["b2"]; h = bn_relu(h, p["g2"], p["be2"])
    h = h @ p["w3"].T + p["b3"]; h = bn_relu(h, p["g3"], p["be3"])
    return h @ p["w4"].T + p["b4"]


def _ref_kernel_precision(x, p):
    """Reference mimicking the kernel's precision choices (bf16 matmul operands, bf16
    layer-1 activation parking, bias-free pre-BN linears, fused BN affine)."""
    xb = x.reshape(x.shape[0], -1).astype(jnp.bfloat16)
    h1 = jnp.dot(xb, p["w1"].T.astype(jnp.bfloat16), preferred_element_type=jnp.float32)
    mean1 = h1.mean(0, keepdims=True)
    var1 = jnp.maximum((h1 * h1).mean(0, keepdims=True) - mean1 * mean1, 0.0)
    scale1 = p["g1"] * jax.lax.rsqrt(var1 + BN_EPS)
    shift1 = p["be1"] - mean1 * scale1
    h1 = h1.astype(jnp.bfloat16).astype(jnp.float32)      # bf16 VMEM parking
    h1n = jnp.maximum(h1 * scale1 + shift1, 0.0)

    def bn_relu2(h, g, be):
        m = h.mean(0, keepdims=True)
        d = h - m
        v = (d * d).mean(0, keepdims=True)
        return jnp.maximum(d * (g * jax.lax.rsqrt(v + BN_EPS)) + be, 0.0)

    h2 = jnp.dot(h1n.astype(jnp.bfloat16), p["w2"].T.astype(jnp.bfloat16),
                 preferred_element_type=jnp.float32)
    h2n = bn_relu2(h2, p["g2"], p["be2"])
    h3 = jnp.dot(h2n.astype(jnp.bfloat16), p["w3"].T.astype(jnp.bfloat16),
                 preferred_element_type=jnp.float32)
    h3n = bn_relu2(h3, p["g3"], p["be3"])
    return h3n @ p["w4"].T + p["b4"]


# ---------------------------------------------------------------------------
# Demo / self-test
# ---------------------------------------------------------------------------
if __name__ == "__main__":
    key = jax.random.PRNGKey(0)
    k_x, k_p, k_x2 = jax.random.split(key, 3)

    params = init_params(k_p)
    packed = pack_params(params)   # one-time: transpose / bf16 / pack small vectors

    # Input: (batch, output_chan_num, extf * sample_pre_symbol, 4) -> flattens to D_IN=128.
    B = 16
    x = jax.random.normal(k_x, (B, OUTPUT_CHAN_NUM, EXTF * SAMPLE_PRE_SYMBOL, 4), jnp.float32)

    out = discriminator_forward(x, packed)
    jax.block_until_ready(out)
    assert out.shape == (B, 1), out.shape

    # Tight check vs. a reference using the kernel's precision choices.
    ref_k = _ref_kernel_precision(x, params)
    assert jnp.allclose(out, ref_k, atol=2e-3, rtol=2e-3), (out, ref_k)

    # Loose sanity check vs. the full-f32 PyTorch-equivalent math (biases included).
    ref_f = _ref_f32(x, params)
    assert jnp.allclose(out, ref_f, atol=1e-1, rtol=1e-1), (out, ref_f)

    # Exercise the streamed multi-tile path (batch split across the grid, masked tail).
    B2 = 300
    x2 = jax.random.normal(k_x2, (B2, OUTPUT_CHAN_NUM, EXTF * SAMPLE_PRE_SYMBOL, 4),
                           jnp.float32)
    out2 = discriminator_forward(x2, packed, block_rows=128)
    jax.block_until_ready(out2)
    assert out2.shape == (B2, 1), out2.shape
    ref2 = _ref_kernel_precision(x2, params)
    assert jnp.allclose(out2, ref2, atol=2e-3, rtol=2e-3), float(jnp.abs(out2 - ref2).max())

    print("KERNEL_OK")
</pallas_src>

<mosaic_0001>
module attributes {stable_mosaic.version = 11 : i64} {
  func.func @discriminator_kernel(%arg0: i32, %arg1: memref<16x128xf32, #tpu.memory_space<vmem>>, %arg2: memref<128x128xbf16, #tpu.memory_space<vmem>>, %arg3: memref<128x32xbf16, #tpu.memory_space<vmem>>, %arg4: memref<32x8xbf16, #tpu.memory_space<vmem>>, %arg5: memref<8x128xf32, #tpu.memory_space<vmem>>, %arg6: memref<16x1xf32, #tpu.memory_space<vmem>>, %arg7: memref<16x128xbf16, #tpu.memory_space<vmem>>, %arg8: memref<1x128xf32, #tpu.memory_space<vmem>>, %arg9: memref<1x128xf32, #tpu.memory_space<vmem>>) attributes {dimension_semantics = [#tpu.dimension_semantics<arbitrary>], iteration_bounds = array<i64: 1>, scalar_prefetch = 0 : i64, scratch_operands = 3 : i64, tpu.core_type = #tpu.core_type<tc>, window_params = [{transform_indices = @transform_0, window_bounds = array<i64: 16, 128>}, {pipeline_mode = #tpu.pipeline_mode<synchronous>, transform_indices = @transform_1, window_bounds = array<i64: 128, 128>}, {pipeline_mode = #tpu.pipeline_mode<synchronous>, transform_indices = @transform_2, window_bounds = array<i64: 128, 32>}, {pipeline_mode = #tpu.pipeline_mode<synchronous>, transform_indices = @transform_3, window_bounds = array<i64: 32, 8>}, {pipeline_mode = #tpu.pipeline_mode<synchronous>, transform_indices = @transform_4, window_bounds = array<i64: 8, 128>}, {pipeline_mode = #tpu.pipeline_mode<synchronous>, transform_indices = @transform_5, window_bounds = array<i64: 16, 1>}]} {
    %c0_i32 = arith.constant 0 : i32
    %0 = arith.cmpi eq, %arg0, %c0_i32 : i32
    %1 = arith.extui %0 : i1 to i32
    %c0_i32_0 = arith.constant 0 : i32
    %2 = arith.cmpi ne, %1, %c0_i32_0 : i32
    scf.if %2 {
      %cst_18 = arith.constant 0.000000e+00 : f32
      %26 = vector.broadcast %cst_18 : f32 to vector<1x128xf32>
      %c0_19 = arith.constant 0 : index
      %c0_20 = arith.constant 0 : index
      %27 = vector.load %arg8[%c0_19, %c0_20] : memref<1x128xf32, #tpu.memory_space<vmem>>, vector<1x128xf32>
      tpu.vector_store %arg8[%c0_19, %c0_20], %26 {strides = array<i32>} : memref<1x128xf32, #tpu.memory_space<vmem>>, vector<1x128xf32>,
      %cst_21 = arith.constant 0.000000e+00 : f32
      %28 = vector.broadcast %cst_21 : f32 to vector<1x128xf32>
      %c0_22 = arith.constant 0 : index
      %c0_23 = arith.constant 0 : index
      %29 = vector.load %arg9[%c0_22, %c0_23] : memref<1x128xf32, #tpu.memory_space<vmem>>, vector<1x128xf32>
      tpu.vector_store %arg9[%c0_22, %c0_23], %28 {strides = array<i32>} : memref<1x128xf32, #tpu.memory_space<vmem>>, vector<1x128xf32>,
    } else {
    }
    %c0 = arith.constant 0 : index
    %c0_1 = arith.constant 0 : index
    %3 = vector.load %arg1[%c0, %c0_1] : memref<16x128xf32, #tpu.memory_space<vmem>>, vector<16x128xf32>
    %4 = arith.truncf %3 : vector<16x128xf32> to vector<16x128xbf16>
    %c0_2 = arith.constant 0 : index
    %c0_3 = arith.constant 0 : index
    %5 = vector.load %arg2[%c0_2, %c0_3] : memref<128x128xbf16, #tpu.memory_space<vmem>>, vector<128x128xbf16>
    %cst = arith.constant dense<0.000000e+00> : vector<16x128xf32>
    %6 = tpu.matmul %4, %5, %cst {dimension_numbers = #tpu.dot_dimension_numbers<[1], [0], [0], [1], [0, 0, 1, 1], [], []>} : vector<16x128xbf16>, vector<128x128xbf16>, vector<16x128xf32> -> vector<16x128xf32>
    %c0_4 = arith.constant 0 : index
    %c0_5 = arith.constant 0 : index
    %7 = vector.load %arg8[%c0_4, %c0_5] : memref<1x128xf32, #tpu.memory_space<vmem>>, vector<1x128xf32>
    %cst_6 = arith.constant dense<0.000000e+00> : vector<128xf32>
    %8 = vector.multi_reduction <add>, %6, %cst_6 [0] : vector<16x128xf32> to vector<128xf32>
    %9 = vector.shape_cast %8 : vector<128xf32> to vector<1x128xf32>
    %10 = arith.addf %7, %9 : vector<1x128xf32>
    %c0_7 = arith.constant 0 : index
    %c0_8 = arith.constant 0 : index
    %11 = vector.load %arg8[%c0_7, %c0_8] : memref<1x128xf32, #tpu.memory_space<vmem>>, vector<1x128xf32>
    tpu.vector_store %arg8[%c0_7, %c0_8], %10 {strides = array<i32>} : memref<1x128xf32, #tpu.memory_space<vmem>>, vector<1x128xf32>,
    %c0_9 = arith.constant 0 : index
    %c0_10 = arith.constant 0 : index
    %12 = vector.load %arg9[%c0_9, %c0_10] : memref<1x128xf32, #tpu.memory_space<vmem>>, vector<1x128xf32>
    %13 = arith.mulf %6, %6 : vector<16x128xf32>
    %cst_11 = arith.constant dense<0.000000e+00> : vector<128xf32>
    %14 = vector.multi_reduction <add>, %13, %cst_11 [0] : vector<16x128xf32> to vector<128xf32>
    %15 = vector.shape_cast %14 : vector<128xf32> to vector<1x128xf32>
    %16 = arith.addf %12, %15 : vector<1x128xf32>
    %c0_12 = arith.constant 0 : index
    %c0_13 = arith.constant 0 : index
    %17 = vector.load %arg9[%c0_12, %c0_13] : memref<1x128xf32, #tpu.memory_space<vmem>>, vector<1x128xf32>
    tpu.vector_store %arg9[%c0_12, %c0_13], %16 {strides = array<i32>} : memref<1x128xf32, #tpu.memory_space<vmem>>, vector<1x128xf32>,
    %c16_i32 = arith.constant 16 : i32
    %18 = arith.muli %arg0, %c16_i32 : i32
    %19 = tpu.assume_multiple %18, 8 : i32
    %20 = arith.truncf %6 : vector<16x128xf32> to vector<16x128xbf16>
    %21 = arith.index_cast %19 : i32 to index
    %c0_14 = arith.constant 0 : index
    %22 = vector.load %arg7[%21, %c0_14] : memref<16x128xbf16, #tpu.memory_space<vmem>>, vector<16x128xbf16>
    tpu.vector_store %arg7[%21, %c0_14], %20 {strides = array<i32>} : memref<16x128xbf16, #tpu.memory_space<vmem>>, vector<16x128xbf16>,
    %c0_i32_15 = arith.constant 0 : i32
    %23 = arith.cmpi eq, %arg0, %c0_i32_15 : i32
    %24 = arith.extui %23 : i1 to i32
    %cst_16 = arith.constant 6.250000e-02 : f32
    %c0_i32_17 = arith.constant 0 : i32
    %25 = arith.cmpi ne, %24, %c0_i32_17 : i32
    scf.if %25 {
      %c0_18 = arith.constant 0 : index
      %c0_19 = arith.constant 0 : index
      %26 = vector.load %arg8[%c0_18, %c0_19] : memref<1x128xf32, #tpu.memory_space<vmem>>, vector<1x128xf32>
      %27 = vector.broadcast %cst_16 : f32 to vector<1x128xf32>
      %28 = arith.mulf %26, %27 : vector<1x128xf32>
      %c0_20 = arith.constant 0 : index
      %c0_21 = arith.constant 0 : index
      %29 = vector.load %arg9[%c0_20, %c0_21] : memref<1x128xf32, #tpu.memory_space<vmem>>, vector<1x128xf32>
      %30 = vector.broadcast %cst_16 : f32 to vector<1x128xf32>
      %31 = arith.mulf %29, %30 : vector<1x128xf32>
      %32 = arith.mulf %28, %28 : vector<1x128xf32>
      %33 = arith.subf %31, %32 : vector<1x128xf32>
      %cst_22 = arith.constant 0.000000e+00 : f32
      %34 = vector.broadcast %cst_22 : f32 to vector<1x128xf32>
      %35 = arith.maximumf %33, %34 : vector<1x128xf32>
      %c0_23 = arith.constant 0 : index
      %c0_24 = arith.constant 0 : index
      %36 = vector.load %arg5[%c0_23, %c0_24] : memref<8x128xf32, #tpu.memory_space<vmem>>, vector<1x128xf32>
      %cst_25 = arith.constant 9.99999974E-6 : f32
      %37 = vector.broadcast %cst_25 : f32 to vector<1x128xf32>
      %38 = arith.addf %35, %37 : vector<1x128xf32>
      %39 = math.rsqrt %38 : vector<1x128xf32>
      %40 = arith.mulf %36, %39 : vector<1x128xf32>
      %c1 = arith.constant 1 : index
      %c0_26 = arith.constant 0 : index
      %41 = vector.load %arg5[%c1, %c0_26] : memref<8x128xf32, #tpu.memory_space<vmem>>, vector<1x128xf32>
      %42 = arith.mulf %28, %40 : vector<1x128xf32>
      %43 = arith.subf %41, %42 : vector<1x128xf32>
      %c0_27 = arith.constant 0 : index
      %c0_28 = arith.constant 0 : index
      %44 = vector.load %arg7[%c0_27, %c0_28] : memref<16x128xbf16, #tpu.memory_space<vmem>>, vector<16x128xbf16>
      %45 = arith.extf %44 : vector<16x128xbf16> to vector<16x128xf32>
      %46 = vector.broadcast %40 : vector<1x128xf32> to vector<16x128xf32>
      %47 = arith.mulf %45, %46 : vector<16x128xf32>
      %48 = vector.broadcast %43 : vector<1x128xf32> to vector<16x128xf32>
      %49 = arith.addf %47, %48 : vector<16x128xf32>
      %cst_29 = arith.constant 0.000000e+00 : f32
      %50 = vector.broadcast %cst_29 : f32 to vector<16x128xf32>
      %51 = arith.maximumf %49, %50 : vector<16x128xf32>
      %52 = arith.truncf %51 : vector<16x128xf32> to vector<16x128xbf16>
      %c0_30 = arith.constant 0 : index
      %c0_31 = arith.constant 0 : index
      %53 = vector.load %arg3[%c0_30, %c0_31] : memref<128x32xbf16, #tpu.memory_space<vmem>>, vector<128x32xbf16>
      %cst_32 = arith.constant dense<0.000000e+00> : vector<16x32xf32>
      %54 = tpu.matmul %52, %53, %cst_32 {dimension_numbers = #tpu.dot_dimension_numbers<[1], [0], [0], [1], [0, 0, 1, 1], [], []>} : vector<16x128xbf16>, vector<128x32xbf16>, vector<16x32xf32> -> vector<16x32xf32>
      %c2 = arith.constant 2 : index
      %c0_33 = arith.constant 0 : index
      %55 = vector.load %arg5[%c2, %c0_33] : memref<8x128xf32, #tpu.memory_space<vmem>>, vector<1x32xf32>
      %c3 = arith.constant 3 : index
      %c0_34 = arith.constant 0 : index
      %56 = vector.load %arg5[%c3, %c0_34] : memref<8x128xf32, #tpu.memory_space<vmem>>, vector<1x32xf32>
      %cst_35 = arith.constant dense<0.000000e+00> : vector<32xf32>
      %57 = vector.multi_reduction <add>, %54, %cst_35 [0] : vector<16x32xf32> to vector<32xf32>
      %58 = vector.shape_cast %57 : vector<32xf32> to vector<1x32xf32>
      %59 = vector.broadcast %cst_16 : f32 to vector<1x32xf32>
      %60 = arith.mulf %58, %59 : vector<1x32xf32>
      %61 = vector.broadcast %60 : vector<1x32xf32> to vector<16x32xf32>
      %62 = arith.subf %54, %61 : vector<16x32xf32>
      %63 = arith.mulf %62, %62 : vector<16x32xf32>
      %cst_36 = arith.constant dense<0.000000e+00> : vector<32xf32>
      %64 = vector.multi_reduction <add>, %63, %cst_36 [0] : vector<16x32xf32> to vector<32xf32>
      %65 = vector.shape_cast %64 : vector<32xf32> to vector<1x32xf32>
      %66 = vector.broadcast %cst_16 : f32 to vector<1x32xf32>
      %67 = arith.mulf %65, %66 : vector<1x32xf32>
      %cst_37 = arith.constant 0.000000e+00 : f32
      %68 = vector.broadcast %cst_37 : f32 to vector<1x32xf32>
      %69 = arith.maximumf %67, %68 : vector<1x32xf32>
      %cst_38 = arith.constant 9.99999974E-6 : f32
      %70 = vector.broadcast %cst_38 : f32 to vector<1x32xf32>
      %71 = arith.addf %69, %70 : vector<1x32xf32>
      %72 = math.rsqrt %71 : vector<1x32xf32>
      %73 = arith.mulf %55, %72 : vector<1x32xf32>
      %74 = vector.broadcast %73 : vector<1x32xf32> to vector<16x32xf32>
      %75 = arith.mulf %62, %74 : vector<16x32xf32>
      %76 = vector.broadcast %56 : vector<1x32xf32> to vector<16x32xf32>
      %77 = arith.addf %75, %76 : vector<16x32xf32>
      %cst_39 = arith.constant 0.000000e+00 : f32
      %78 = vector.broadcast %cst_39 : f32 to vector<16x32xf32>
      %79 = arith.maximumf %77, %78 : vector<16x32xf32>
      %80 = arith.truncf %79 : vector<16x32xf32> to vector<16x32xbf16>
      %c0_40 = arith.constant 0 : index
      %c0_41 = arith.constant 0 : index
      %81 = vector.load %arg4[%c0_40, %c0_41] : memref<32x8xbf16, #tpu.memory_space<vmem>>, vector<32x8xbf16>
      %cst_42 = arith.constant dense<0.000000e+00> : vector<16x8xf32>
      %82 = tpu.matmul %80, %81, %cst_42 {dimension_numbers = #tpu.dot_dimension_numbers<[1], [0], [0], [1], [0, 0, 1, 1], [], []>} : vector<16x32xbf16>, vector<32x8xbf16>, vector<16x8xf32> -> vector<16x8xf32>
      %c4 = arith.constant 4 : index
      %c0_43 = arith.constant 0 : index
      %83 = vector.load %arg5[%c4, %c0_43] : memref<8x128xf32, #tpu.memory_space<vmem>>, vector<1x8xf32>
      %c5 = arith.constant 5 : index
      %c0_44 = arith.constant 0 : index
      %84 = vector.load %arg5[%c5, %c0_44] : memref<8x128xf32, #tpu.memory_space<vmem>>, vector<1x8xf32>
      %cst_45 = arith.constant dense<0.000000e+00> : vector<8xf32>
      %85 = vector.multi_reduction <add>, %82, %cst_45 [0] : vector<16x8xf32> to vector<8xf32>
      %86 = vector.shape_cast %85 : vector<8xf32> to vector<1x8xf32>
      %87 = vector.broadcast %cst_16 : f32 to vector<1x8xf32>
      %88 = arith.mulf %86, %87 : vector<1x8xf32>
      %89 = vector.broadcast %88 : vector<1x8xf32> to vector<16x8xf32>
      %90 = arith.subf %82, %89 : vector<16x8xf32>
      %91 = arith.mulf %90, %90 : vector<16x8xf32>
      %cst_46 = arith.constant dense<0.000000e+00> : vector<8xf32>
      %92 = vector.multi_reduction <add>, %91, %cst_46 [0] : vector<16x8xf32> to vector<8xf32>
      %93 = vector.shape_cast %92 : vector<8xf32> to vector<1x8xf32>
      %94 = vector.broadcast %cst_16 : f32 to vector<1x8xf32>
      %95 = arith.mulf %93, %94 : vector<1x8xf32>
      %cst_47 = arith.constant 0.000000e+00 : f32
      %96 = vector.broadcast %cst_47 : f32 to vector<1x8xf32>
      %97 = arith.maximumf %95, %96 : vector<1x8xf32>
      %cst_48 = arith.constant 9.99999974E-6 : f32
      %98 = vector.broadcast %cst_48 : f32 to vector<1x8xf32>
      %99 = arith.addf %97, %98 : vector<1x8xf32>
      %100 = math.rsqrt %99 : vector<1x8xf32>
      %101 = arith.mulf %83, %100 : vector<1x8xf32>
      %102 = vector.broadcast %101 : vector<1x8xf32> to vector<16x8xf32>
      %103 = arith.mulf %90, %102 : vector<16x8xf32>
      %104 = vector.broadcast %84 : vector<1x8xf32> to vector<16x8xf32>
      %105 = arith.addf %103, %104 : vector<16x8xf32>
      %cst_49 = arith.constant 0.000000e+00 : f32
      %106 = vector.broadcast %cst_49 : f32 to vector<16x8xf32>
      %107 = arith.maximumf %105, %106 : vector<16x8xf32>
      %c6 = arith.constant 6 : index
      %c0_50 = arith.constant 0 : index
      %108 = vector.load %arg5[%c6, %c0_50] : memref<8x128xf32, #tpu.memory_space<vmem>>, vector<1x8xf32>
      %c7 = arith.constant 7 : index
      %c0_51 = arith.constant 0 : index
      %109 = vector.load %arg5[%c7, %c0_51] : memref<8x128xf32, #tpu.memory_space<vmem>>, vector<1x1xf32>
      %110 = vector.broadcast %108 : vector<1x8xf32> to vector<16x8xf32>
      %111 = arith.mulf %107, %110 : vector<16x8xf32>
      %cst_52 = arith.constant dense<0.000000e+00> : vector<16xf32>
      %112 = vector.multi_reduction <add>, %111, %cst_52 [1] : vector<16x8xf32> to vector<16xf32>
      %113 = vector.shape_cast %112 : vector<16xf32> to vector<16x1xf32>
      %114 = vector.broadcast %109 : vector<1x1xf32> to vector<16x1xf32>
      %115 = arith.addf %113, %114 : vector<16x1xf32>
      %c0_53 = arith.constant 0 : index
      %c0_54 = arith.constant 0 : index
      %116 = vector.load %arg6[%c0_53, %c0_54] : memref<16x1xf32, #tpu.memory_space<vmem>>, vector<16x1xf32>
      tpu.vector_store %arg6[%c0_53, %c0_54], %115 {strides = array<i32>} : memref<16x1xf32, #tpu.memory_space<vmem>>, vector<16x1xf32>,
    } else {
    }
    return
  }
  func.func @transform_0(%arg0: i32) -> (i32, i32) {
    %c0_i32 = arith.constant 0 : i32
    %c0_i32_0 = arith.constant 0 : i32
    return %arg0, %c0_i32 : i32, i32
  }
  func.func @transform_1(%arg0: i32) -> (i32, i32) {
    %c0_i32 = arith.constant 0 : i32
    %c0_i32_0 = arith.constant 0 : i32
    %c0_i32_1 = arith.constant 0 : i32
    return %c0_i32, %c0_i32_0 : i32, i32
  }
  func.func @transform_2(%arg0: i32) -> (i32, i32) {
    %c0_i32 = arith.constant 0 : i32
    %c0_i32_0 = arith.constant 0 : i32
    %c0_i32_1 = arith.constant 0 : i32
    return %c0_i32, %c0_i32_0 : i32, i32
  }
  func.func @transform_3(%arg0: i32) -> (i32, i32) {
    %c0_i32 = arith.constant 0 : i32
    %c0_i32_0 = arith.constant 0 : i32
    %c0_i32_1 = arith.constant 0 : i32
    return %c0_i32, %c0_i32_0 : i32, i32
  }
  func.func @transform_4(%arg0: i32) -> (i32, i32) {
    %c0_i32 = arith.constant 0 : i32
    %c0_i32_0 = arith.constant 0 : i32
    %c0_i32_1 = arith.constant 0 : i32
    return %c0_i32, %c0_i32_0 : i32, i32
  }
  func.func @transform_5(%arg0: i32) -> (i32, i32) {
    %c0_i32 = arith.constant 0 : i32
    %c0_i32_0 = arith.constant 0 : i32
    %c0_i32_1 = arith.constant 0 : i32
    return %c0_i32, %c0_i32_0 : i32, i32
  }
}

</mosaic_0001>

<llo_original>
// kernel: discriminator_forward.1
$region0: #{discriminator_forward.1}
  #allocation0 [shape = 'u32[]', space=smem, size = 0x4, offset = 0x4, fixed_abs, tag = 'smem constant byte address 0x4 - core index']
  #allocation1 [shape = 'u32[72,128]{1,0:T(1,128)}', space=vmem, size = 0x9000, scoped, tag = 'internal scratch']
  #allocation2 [shape = 'bf16[16,128]{1,0:T(8,128)(2,1)}', space=vmem, size = 0x1000, scoped, tag = 'scratch operand']
  #allocation3 [shape = 'f32[1,128]{1,0:T(1,128)}', space=vmem, size = 0x200, scoped, tag = 'scratch operand']
  #allocation4 [shape = 'f32[1,128]{1,0:T(1,128)}', space=vmem, size = 0x200, scoped, tag = 'scratch operand']
  %s0 = inlined_call_operand.vmem [shape: f32[16,128], index: 0, kind: input, shape index: {}]
  %s1 = inlined_call_operand.vmem [shape: bf16[128,128], index: 1, kind: input, shape index: {}]
  %s2 = inlined_call_operand.vmem [shape: bf16[128,32], index: 2, kind: input, shape index: {}]
  %s3 = inlined_call_operand.vmem [shape: bf16[32,8], index: 3, kind: input, shape index: {}]
  %s4 = inlined_call_operand.vmem [shape: f32[8,128], index: 4, kind: input, shape index: {}]
  %s5 = inlined_call_operand.vmem [shape: f32[16,1], index: 5, kind: output, shape index: {}]
  %s6 = sld [smem:[#allocation0]]
  $region38: #{discriminator_forward.1} parent=0
    _
  %s8 = ssub.s32 1, %s6
  %s9 = scalar_select 0, %s8, %s6
  // Predicated region
  $region2: #{discriminator_forward.1} parent=0 // pred_check
    _
  $region3: #{discriminator_forward.1} parent=0 // pred_check_branch
    %11 = sbr.rel (0) target = $region5
  $region4: #{discriminator_forward.1} parent=0 // pred_region
    _
  $region5: #{discriminator_forward.1} parent=0 // pred_fallthru
    _
  // Predicated region
  $region6: #{discriminator_forward.1} parent=0 // pred_check
    _
  $region7: #{discriminator_forward.1} parent=0 // pred_check_branch
    %13 = sbr.rel (0) target = $region9
  $region8: #{discriminator_forward.1} parent=0 // pred_region
    _
  $region9: #{discriminator_forward.1} parent=0 // pred_fallthru
    _
  // Predicated region
  $region10: #{discriminator_forward.1} parent=0 // pred_check
    _
  $region11: #{discriminator_forward.1} parent=0 // pred_check_branch
    %15 = sbr.rel (0) target = $region13
  $region12: #{discriminator_forward.1} parent=0 // pred_region
    _
  $region13: #{discriminator_forward.1} parent=0 // pred_fallthru
    _
  // Predicated region
  $region14: #{discriminator_forward.1} parent=0 // pred_check
    _
  $region15: #{discriminator_forward.1} parent=0 // pred_check_branch
    %17 = sbr.rel (0) target = $region17
  $region16: #{discriminator_forward.1} parent=0 // pred_region
    _
  $region17: #{discriminator_forward.1} parent=0 // pred_fallthru
    _
  // Predicated region
  $region18: #{discriminator_forward.1} parent=0 // pred_check
    _
  $region19: #{discriminator_forward.1} parent=0 // pred_check_branch
    %19 = sbr.rel (0) target = $region21
  $region20: #{discriminator_forward.1} parent=0 // pred_region
    _
  $region21: #{discriminator_forward.1} parent=0 // pred_fallthru
    _
  %p21 = scmp.eq.s32.totalorder 0, 0
  // Predicated region
  $region22: #{discriminator_forward.1} parent=0 // pred_check
    %p22 = pneg %p21
  $region23: #{discriminator_forward.1} parent=0 // pred_check_branch
    %24 = sbr.rel (%p22) target = $region25
  $region24: #{discriminator_forward.1} parent=0 // pred_region
    %25 = vst [vmem:[#allocation3] sm:$0x1] 0.0
    %26 = vst [vmem:[#allocation4] sm:$0x1] 0.0
  $region25: #{discriminator_forward.1} parent=0 // pred_fallthru
    _
  %v27 = vld [vmem:[%s0] sm:$0xff]
  %v28 = vld [vmem:[%s0 + $0x8] sm:$0xff]
  %v29 = vpack.c.bf16 %v28, %v27
  %v30 = vld [vmem:[%s1] sm:$0xf]
  %v31 = vld [vmem:[%s1 + $0x4] sm:$0xf]
  %v32 = vld [vmem:[%s1 + $0x8] sm:$0xf]
  %v33 = vld [vmem:[%s1 + $0xc] sm:$0xf]
  %v34 = vld [vmem:[%s1 + $0x10] sm:$0xf]
  %v35 = vld [vmem:[%s1 + $0x14] sm:$0xf]
  %v36 = vld [vmem:[%s1 + $0x18] sm:$0xf]
  %v37 = vld [vmem:[%s1 + $0x1c] sm:$0xf]
  %v38 = vld [vmem:[%s1 + $0x20] sm:$0xf]
  %v39 = vld [vmem:[%s1 + $0x24] sm:$0xf]
  %v40 = vld [vmem:[%s1 + $0x28] sm:$0xf]
  %v41 = vld [vmem:[%s1 + $0x2c] sm:$0xf]
  %v42 = vld [vmem:[%s1 + $0x30] sm:$0xf]
  %v43 = vld [vmem:[%s1 + $0x34] sm:$0xf]
  %v44 = vld [vmem:[%s1 + $0x38] sm:$0xf]
  %v45 = vld [vmem:[%s1 + $0x3c] sm:$0xf]
  %v62 = vunpack.c.l.b16 %v30
  %v63 = vunpack.c.l.b16 %v31
  %v64 = vunpack.c.l.b16 %v32
  %v65 = vunpack.c.l.b16 %v33
  %v66 = vunpack.c.l.b16 %v34
  %v67 = vunpack.c.l.b16 %v35
  %v68 = vunpack.c.l.b16 %v36
  %v69 = vunpack.c.l.b16 %v37
  %v70 = vunpack.c.l.b16 %v38
  %v71 = vunpack.c.l.b16 %v39
  %v72 = vunpack.c.l.b16 %v40
  %v73 = vunpack.c.l.b16 %v41
  %v74 = vunpack.c.l.b16 %v42
  %v75 = vunpack.c.l.b16 %v43
  %v76 = vunpack.c.l.b16 %v44
  %v77 = vunpack.c.l.b16 %v45
  %v78 = vpack.c.b16 %v63, %v62
  %v79 = vpack.c.b16 %v65, %v64
  %v80 = vpack.c.b16 %v67, %v66
  %v81 = vpack.c.b16 %v69, %v68
  %v82 = vpack.c.b16 %v71, %v70
  %v83 = vpack.c.b16 %v73, %v72
  %v84 = vpack.c.b16 %v75, %v74
  %v85 = vpack.c.b16 %v77, %v76
  %94 = vmatpush.bf16.msra.mxu0 %v85
  %95 = vmatpush.bf16.msra.mxu0 %v84
  %96 = vmatpush.bf16.msra.mxu0 %v83
  %97 = vmatpush.bf16.msra.mxu0 %v82
  %98 = vmatpush.bf16.msra.mxu0 %v81
  %99 = vmatpush.bf16.msra.mxu0 %v80
  %100 = vmatpush.bf16.msra.mxu0 %v79
  %101 = vmatpush.bf16.msra.mxu0 %v78
  %102 = vmatmul.bf16.gmra.mxu0 %v29
  %v103 = vpop.f32.mrf.mxu0
  %v104 = vadd.f32 0.0, %v103
  %v105 = vpop.f32.mrf.mxu0
  %v106 = vadd.f32 0.0, %v105
  %107 = vdwg.mxu0
  %v108 = vld [vmem:[#allocation3] sm:$0x1]
  %v109 = vadd.f32 %v104, %v106
  %v110 = vrot.slane %v109, 4
  %v111 = vadd.f32 %v109, %v110
  %v112 = vrot.slane %v111, 2
  %v113 = vadd.f32 %v111, %v112
  %v114 = vrot.slane %v113, 1
  %v115 = vadd.f32 %v113, %v114
  %v116 = vadd.f32 %v108, %v115
  %117 = vst [vmem:[#allocation3] sm:$0x1] %v116
  %v118 = vld [vmem:[#allocation4] sm:$0x1]
  %v119 = vmul.f32 %v104, %v104
  %v120 = vmul.f32 %v106, %v106
  %v121 = vadd.f32 %v119, %v120
  %v122 = vrot.slane %v121, 4
  %v123 = vadd.f32 %v121, %v122
  %v124 = vrot.slane %v123, 2
  %v125 = vadd.f32 %v123, %v124
  %v126 = vrot.slane %v125, 1
  %v127 = vadd.f32 %v125, %v126
  %v128 = vadd.f32 %v118, %v127
  %129 = vst [vmem:[#allocation4] sm:$0x1] %v128
  %s130 = smul.u32 0, 16
  %v131 = vpack.c.bf16 %v104, %v104
  %v132 = vpack.c.bf16 %v106, %v106
  %s133 = sshra.s32 %s130, 3
  %s134 = sand.u32 %s130, 7
  %s135 = smul.addr %s133, 4
  %s136 = scalar_lea.vmem [#allocation2], %s135
  %137 = vst [vmem:[%s136] sm:$0xf] %v131
  %138 = vst [vmem:[%s136 + $0x4] sm:$0xf] %v132
  // Predicated region
  $region26: #{discriminator_forward.1} parent=0 // pred_check
    %p139 = pneg %p21
  $region27: #{discriminator_forward.1} parent=0 // pred_check_branch
    %141 = sbr.rel (%p139) target = $region29
  $region28: #{discriminator_forward.1} parent=0 // pred_region
    %v142 = vld [vmem:[#allocation3] sm:$0x1]
    %v143 = vmul.f32 %v142, 0.0625
    %v144 = vld [vmem:[#allocation4] sm:$0x1]
    %v145 = vmul.f32 %v144, 0.0625
    %v146 = vmul.f32 %v143, %v143
    %v147 = vsub.f32 %v145, %v146
    %v148 = vmax.f32 %v147, 0.0
    %v149 = vld [vmem:[%s4] sm:$0x1]
    %v150 = vadd.f32 %v148, 1e-05
    %v151 = vrsqrt.pop %v150
    %v152 = vmul.f32 %v151, %v150
    %v153 = vmul.f32 %v152, %v151
    %v154 = vmul.f32 0.5, %v153
    %v155 = vsub.f32 1.5, %v154
    %v156 = vmul.f32 %v151, %v155
    %vm157 = vweird.f32 %v150
    %vm158 = vweird.f32 %v151
    %vm159 = vmor %vm157, %vm158
    %v160 = vsel %vm159, %v151, %v156
    %v161 = vmul.f32 %v149, %v160
    %v162 = vld [vmem:[%s4 + $0x1] sm:$0x1]
    %v163 = vmul.f32 %v143, %v161
    %v164 = vsub.f32 %v162, %v163
    %v165 = vld [vmem:[#allocation2] sm:$0xf]
    %v166 = vld [vmem:[#allocation2 + $0x4] sm:$0xf]
    %v167 = vunpack.c.l.bf16 %v165
    %v168 = vunpack.c.l.bf16 %v166
    %v169 = vperm.slane %v161, 0
    %v170 = vmul.f32 %v167, %v169
    %v171 = vmul.f32 %v168, %v169
    %v172 = vperm.slane %v164, 0
    %v173 = vadd.f32 %v170, %v172
    %v174 = vadd.f32 %v171, %v172
    %v175 = vmax.f32 %v173, 0.0
    %v176 = vmax.f32 %v174, 0.0
    %v177 = vpack.c.bf16 %v176, %v175
    %v178 = vld [vmem:[%s2] sm:$0xf]
    %v179 = vld [vmem:[%s2 + $0x4] sm:$0xf]
    %v180 = vld [vmem:[%s2 + $0x8] sm:$0xf]
    %v181 = vld [vmem:[%s2 + $0xc] sm:$0xf]
    %v182 = vld [vmem:[%s2 + $0x10] sm:$0xf]
    %v183 = vld [vmem:[%s2 + $0x14] sm:$0xf]
    %v184 = vld [vmem:[%s2 + $0x18] sm:$0xf]
    %v185 = vld [vmem:[%s2 + $0x1c] sm:$0xf]
    %v186 = vld [vmem:[%s2 + $0x20] sm:$0xf]
    %v187 = vld [vmem:[%s2 + $0x24] sm:$0xf]
    %v188 = vld [vmem:[%s2 + $0x28] sm:$0xf]
    %v189 = vld [vmem:[%s2 + $0x2c] sm:$0xf]
    %v190 = vld [vmem:[%s2 + $0x30] sm:$0xf]
    %v191 = vld [vmem:[%s2 + $0x34] sm:$0xf]
    %v192 = vld [vmem:[%s2 + $0x38] sm:$0xf]
    %v193 = vld [vmem:[%s2 + $0x3c] sm:$0xf]
    %v210 = vunpack.c.l.b16 %v178
    %v211 = vunpack.c.l.b16 %v179
    %v212 = vunpack.c.l.b16 %v180
    %v213 = vunpack.c.l.b16 %v181
    %v214 = vunpack.c.l.b16 %v182
    %v215 = vunpack.c.l.b16 %v183
    %v216 = vunpack.c.l.b16 %v184
    %v217 = vunpack.c.l.b16 %v185
    %v218 = vunpack.c.l.b16 %v186
    %v219 = vunpack.c.l.b16 %v187
    %v220 = vunpack.c.l.b16 %v188
    %v221 = vunpack.c.l.b16 %v189
    %v222 = vunpack.c.l.b16 %v190
    %v223 = vunpack.c.l.b16 %v191
    %v224 = vunpack.c.l.b16 %v192
    %v225 = vunpack.c.l.b16 %v193
    %v226 = vpack.c.b16 %v211, %v210
    %v227 = vpack.c.b16 %v213, %v212
    %v228 = vpack.c.b16 %v215, %v214
    %v229 = vpack.c.b16 %v217, %v216
    %v230 = vpack.c.b16 %v219, %v218
    %v231 = vpack.c.b16 %v221, %v220
    %v232 = vpack.c.b16 %v223, %v222
    %v233 = vpack.c.b16 %v225, %v224
    %242 = vmatpush.bf16.msra.mxu0 %v233
    %243 = vmatpush.bf16.msra.mxu0 %v232
    %244 = vmatpush.bf16.msra.mxu0 %v231
    %245 = vmatpush.bf16.msra.mxu0 %v230
    %246 = vmatpush.bf16.msra.mxu0 %v229
    %247 = vmatpush.bf16.msra.mxu0 %v228
    %248 = vmatpush.bf16.msra.mxu0 %v227
    %249 = vmatpush.bf16.msra.mxu0 %v226
    %250 = vmatmul.bf16.gmra.mxu0 %v177
    %v251 = vpop.f32.mrf.mxu0
    %v252 = vadd.f32 0.0, %v251
    %v253 = vpop.f32.mrf.mxu0
    %v254 = vadd.f32 0.0, %v253
    %255 = vdwg.mxu0
    %v256 = vld [vmem:[%s4 + $0x2] sm:$0x1]
    %v257 = vld [vmem:[%s4 + $0x3] sm:$0x1]
    %vm258 = vcmask 261120
    %v259 = vsel %vm258, %v252, 0.0
    %v260 = vsel %vm258, %v254, 0.0
    %v261 = vadd.f32 %v259, %v260
    %v262 = vrot.slane %v261, 4
    %v263 = vadd.f32 %v261, %v262
    %v264 = vrot.slane %v263, 2
    %v265 = vadd.f32 %v263, %v264
    %v266 = vrot.slane %v265, 1
    %v267 = vadd.f32 %v265, %v266
    %v268 = vmul.f32 %v267, 0.0625
    %v269 = vsub.f32 %v252, %v268
    %v270 = vsub.f32 %v254, %v268
    %v271 = vmul.f32 %v269, %v269
    %v272 = vmul.f32 %v270, %v270
    %v273 = vsel %vm258, %v271, 0.0
    %v274 = vsel %vm258, %v272, 0.0
    %v275 = vadd.f32 %v273, %v274
    %v276 = vrot.slane %v275, 4
    %v277 = vadd.f32 %v275, %v276
    %v278 = vrot.slane %v277, 2
    %v279 = vadd.f32 %v277, %v278
    %v280 = vrot.slane %v279, 1
    %v281 = vadd.f32 %v279, %v280
    %v282 = vmul.f32 %v281, 0.0625
    %v283 = vmax.f32 %v282, 0.0
    %v284 = vadd.f32 %v283, 1e-05
    %v285 = vrsqrt.pop %v284
    %v286 = vmul.f32 %v285, %v284
    %v287 = vmul.f32 %v286, %v285
    %v288 = vmul.f32 0.5, %v287
    %v289 = vsub.f32 1.5, %v288
    %v290 = vmul.f32 %v285, %v289
    %vm291 = vweird.f32 %v284
    %vm292 = vweird.f32 %v285
    %vm293 = vmor %vm291, %vm292
    %v294 = vsel %vm293, %v285, %v290
    %v295 = vmul.f32 %v256, %v294
    %v296 = vperm.slane %v295, 0
    %v297 = vmul.f32 %v269, %v296
    %v298 = vmul.f32 %v270, %v296
    %v299 = vperm.slane %v257, 0
    %v300 = vadd.f32 %v297, %v299
    %v301 = vadd.f32 %v298, %v299
    %v302 = vmax.f32 %v300, 0.0
    %v303 = vmax.f32 %v301, 0.0
    %v304 = vpack.c.bf16 %v303, %v302
    %v305 = vld [vmem:[%s3] sm:$0xf]
    %v306 = vld [vmem:[%s3 + $0x4] sm:$0xf]
    %v307 = vld [vmem:[%s3 + $0x8] sm:$0xf]
    %v308 = vld [vmem:[%s3 + $0xc] sm:$0xf]
    %v313 = vunpack.c.l.b16 %v305
    %v314 = vunpack.c.l.b16 %v306
    %v315 = vunpack.c.l.b16 %v307
    %v316 = vunpack.c.l.b16 %v308
    %v317 = vpack.c.b16 %v314, %v313
    %v318 = vpack.c.b16 %v316, %v315
    %v322 = vsel %vm258, %v304, 0
    %324 = vmatpush.bf16.msra.mxu0 0
    %325 = vmatpush.bf16.msra.mxu0 0
    %326 = vmatpush.bf16.msra.mxu0 0
    %327 = vmatpush.bf16.msra.mxu0 0
    %328 = vmatpush.bf16.msra.mxu0 0
    %329 = vmatpush.bf16.msra.mxu0 0
    %330 = vmatpush.bf16.msra.mxu0 %v318
    %331 = vmatpush.bf16.msra.mxu0 %v317
    %332 = vmatmul.bf16.gmra.mxu0 %v322
    %v333 = vpop.f32.mrf.mxu0
    %v334 = vadd.f32 0.0, %v333
    %v335 = vpop.f32.mrf.mxu0
    %v336 = vadd.f32 0.0, %v335
    %337 = vdwg.mxu0
    %v338 = vld [vmem:[%s4 + $0x4] sm:$0x1]
    %v339 = vld [vmem:[%s4 + $0x5] sm:$0x1]
    %vm340 = vcmask 64512
    %v341 = vsel %vm340, %v334, 0.0
    %v342 = vsel %vm340, %v336, 0.0
    %v343 = vadd.f32 %v341, %v342
    %v344 = vrot.slane %v343, 4
    %v345 = vadd.f32 %v343, %v344
    %v346 = vrot.slane %v345, 2
    %v347 = vadd.f32 %v345, %v346
    %v348 = vrot.slane %v347, 1
    %v349 = vadd.f32 %v347, %v348
    %v350 = vmul.f32 %v349, 0.0625
    %v351 = vsub.f32 %v334, %v350
    %v352 = vsub.f32 %v336, %v350
    %v353 = vmul.f32 %v351, %v351
    %v354 = vmul.f32 %v352, %v352
    %v355 = vsel %vm340, %v353, 0.0
    %v356 = vsel %vm340, %v354, 0.0
    %v357 = vadd.f32 %v355, %v356
    %v358 = vrot.slane %v357, 4
    %v359 = vadd.f32 %v357, %v358
    %v360 = vrot.slane %v359, 2
    %v361 = vadd.f32 %v359, %v360
    %v362 = vrot.slane %v361, 1
    %v363 = vadd.f32 %v361, %v362
    %v364 = vmul.f32 %v363, 0.0625
    %v365 = vmax.f32 %v364, 0.0
    %v366 = vadd.f32 %v365, 1e-05
    %v367 = vrsqrt.pop %v366
    %v368 = vmul.f32 %v367, %v366
    %v369 = vmul.f32 %v368, %v367
    %v370 = vmul.f32 0.5, %v369
    %v371 = vsub.f32 1.5, %v370
    %v372 = vmul.f32 %v367, %v371
    %vm373 = vweird.f32 %v366
    %vm374 = vweird.f32 %v367
    %vm375 = vmor %vm373, %vm374
    %v376 = vsel %vm375, %v367, %v372
    %v377 = vmul.f32 %v338, %v376
    %v378 = vperm.slane %v377, 0
    %v379 = vmul.f32 %v351, %v378
    %v380 = vmul.f32 %v352, %v378
    %v381 = vperm.slane %v339, 0
    %v382 = vadd.f32 %v379, %v381
    %v383 = vadd.f32 %v380, %v381
    %v384 = vmax.f32 %v382, 0.0
    %v385 = vmax.f32 %v383, 0.0
    %v386 = vld [vmem:[%s4 + $0x6] sm:$0x1]
    %v387 = vld [vmem:[%s4 + $0x7] sm:$0x1]
    %v388 = vperm.slane %v386, 0
    %v389 = vmul.f32 %v384, %v388
    %v390 = vmul.f32 %v385, %v388
    %v391 = vsel %vm340, %v389, 0.0
    %392 = vadd.xlane.f32.xlu0 %v391
    %v393 = vpop.xlane.xlu0 %392
    %v394 = vsel %vm340, %v390, 0.0
    %395 = vadd.xlane.f32.xlu0 %v394
    %v396 = vpop.xlane.xlu0 %395
    %v397 = vperm.slane %v387, 0
    %v398 = vadd.f32 %v393, %v397
    %v399 = vadd.f32 %v396, %v397
    %vm400 = vcmask 7168
    %401 = vst.msk [vmem:[%s5] sm:$0xff] %vm400, %v398
    %402 = vst.msk [vmem:[%s5 + $0x8] sm:$0xff] %vm400, %v399
  $region29: #{discriminator_forward.1} parent=0 // pred_fallthru
    _
  // Predicated region
  $region30: #{discriminator_forward.1} parent=0 // pred_check
    _
  $region31: #{discriminator_forward.1} parent=0 // pred_check_branch
    %404 = sbr.rel (0) target = $region33
  $region32: #{discriminator_forward.1} parent=0 // pred_region
    _
  $region33: #{discriminator_forward.1} parent=0 // pred_fallthru
    _
  // Predicated region
  $region34: #{discriminator_forward.1} parent=0 // pred_check
    _
  $region35: #{discriminator_forward.1} parent=0 // pred_check_branch
    %406 = sbr.rel (0) target = $region37
  $region36: #{discriminator_forward.1} parent=0 // pred_region
    _
  $region37: #{discriminator_forward.1} parent=0 // pred_fallthru
    _

</llo_original>
